<compile_context>
chip_gen: v7x
topology: tpu7x:2x2x1
jax: 0.10.0
libtpu: 0.0.40
codegen_flags: <defaults>
</compile_context>

<pallas_src>
import numpy as np
import jax
import jax.numpy as jnp
from jax import lax
from jax.experimental import pallas as pl
from jax.experimental.pallas import tpu as pltpu

# ---------------------------------------------------------------------------
# Problem sizes (small, consistent with a seq=8 / hidden=32 style module)
# ---------------------------------------------------------------------------
N = 8         # batch of feature rows
F_IN = 32     # input feature dim  (irreps_in  dim)
HID = 64      # hidden dim between first and second
F_OUT = 32    # output feature dim (irreps_out dim) == F_IN -> residual applies
F_PAD = 128   # lane-dense padded feature width (multiple of 128)

DROP_P = 0.1
BN_EPS = 1e-5
# Python / NumPy scalars only: these lower as jaxpr *literals*, never as
# captured array constants (the previous jnp.uint32 constant broke tracing).
DROP_THRESH = np.uint32(int(DROP_P * (1 << 32)))   # exact uint32 threshold
KEEP_SCALE = 1.0 / (1.0 - DROP_P)
GOLDEN = np.uint32(0x9E3779B9)


def _hash_u32(x):
    # Counter-based avalanche hash (xxhash/PCG style).  Pure 32-bit VPU ops;
    # NumPy-scalar multipliers stay literals in the kernel jaxpr.
    x = x * np.uint32(2654435761)
    x = x ^ (x >> 16)
    x = x * np.uint32(2246822519)
    x = x ^ (x >> 13)
    x = x * np.uint32(3266489917)
    x = x ^ (x >> 16)
    return x


def compose_kernel(seed_ref,                     # SMEM scalar
                   x_ref, wc_ref, params_ref,    # VMEM inputs
                   o_ref):                       # VMEM output
    x = x_ref[...]                               # (N, F_PAD)

    # ---- folded first+second: single Linear (one MXU matmul) -------------
    y = jnp.dot(x, wc_ref[...], preferred_element_type=jnp.float32)
    y = y + params_ref[0:1, :]                   # bc row

    # ---- BatchNorm1d (training: batch stats, biased var, fused affine) ---
    # Two independent reductions (can co-issue on the XLU); var = E[y^2]-m^2.
    # TODO(synk): slightly less numerically robust than the two-pass variance
    # for features with very large means (fine at these scales).
    mean = jnp.mean(y, axis=0, keepdims=True)            # (1, F_PAD)
    mean_sq = jnp.mean(y * y, axis=0, keepdims=True)     # (1, F_PAD)
    var = mean_sq - mean * mean
    inv_std = lax.rsqrt(var + BN_EPS)                    # EUP slot
    scale_bn = params_ref[1:2, :] * inv_std              # gamma row
    # Dropout keep-scale folded into the per-feature scale/shift.
    scale = scale_bn * KEEP_SCALE
    shift = (params_ref[2:3, :] - mean * scale_bn) * KEEP_SCALE   # beta row

    # ---- Dropout mask (training mode, inverted scaling already folded) ---
    # Deterministic counter hash; exact integer-domain threshold compare.
    seed = seed_ref[0].astype(jnp.uint32)
    rows = lax.broadcasted_iota(jnp.int32, y.shape, 0)
    cols = lax.broadcasted_iota(jnp.int32, y.shape, 1)
    ctr = (rows * y.shape[1] + cols).astype(jnp.uint32)
    bits = _hash_u32(ctr + seed * GOLDEN)
    keep = bits >= DROP_THRESH

    # ---- BN-affine + dropout + residual in one pass -----------------------
    o_ref[...] = jnp.where(keep, y * scale + shift, 0.0) + x   # full (8,128) store


def prepare_params(w1, b1, w2, b2, gamma, beta):
    """One-time host-side prep: fold the two Linears and pad to lane-dense
    (…,128) tiles.  Call once; reuse the results for every forward call."""
    # (x @ W1 + b1) @ W2 + b2  ==  x @ (W1 @ W2) + (b1 @ W2 + b2)
    wc = w1 @ w2                                          # (F_IN, F_OUT)
    bc = b1 @ w2 + b2                                     # (1, F_OUT)

    wc_p = jnp.pad(wc, ((0, F_PAD - F_IN), (0, F_PAD - F_OUT)))   # (128,128)
    # Coalesce the three (1,F_OUT) vectors into one (8,128) params tile:
    #   row 0 = bc, row 1 = gamma, row 2 = beta, remaining rows zero.
    params = jnp.zeros((8, F_PAD), jnp.float32)
    params = params.at[0, :F_OUT].set(bc[0])
    params = params.at[1, :F_OUT].set(gamma[0])
    params = params.at[2, :F_OUT].set(beta[0])
    return wc_p, params


def compose_forward(x, wc_p, params, seed):
    # Per-call work: pad x to 128 lanes, launch the kernel, slice the result.
    # Padded lanes carry exact zeros end-to-end (wc/bc/gamma/beta padded with
    # zeros => BN/dropout output 0 there), so the final slice is bit-exact.
    x_p = jnp.pad(x, ((0, 0), (0, F_PAD - F_IN)))         # (N, 128)

    vmem = pl.BlockSpec(memory_space=pltpu.MemorySpace.VMEM)
    smem = pl.BlockSpec(memory_space=pltpu.MemorySpace.SMEM)
    out_p = pl.pallas_call(
        compose_kernel,
        out_shape=jax.ShapeDtypeStruct((N, F_PAD), jnp.float32),
        in_specs=[smem, vmem, vmem, vmem],
        out_specs=vmem,
        cost_estimate=pl.CostEstimate(
            flops=2 * N * F_PAD * F_PAD,
            transcendentals=F_PAD,
            bytes_accessed=4 * (N * F_PAD + F_PAD * F_PAD + 8 * F_PAD + N * F_PAD),
        ),
    )(seed, x_p, wc_p, params)
    # TODO(synk): if the consumer accepts the padded (N,128) layout, drop this
    # slice (it is a separate XLA kernel in a launch-bound workload).
    return out_p[:, :F_OUT]


# TODO(synk): PyTorch BatchNorm1d in training mode also updates
# running_mean/running_var; those buffer updates are not emitted here.
# TODO(synk): dropout mask is a deterministic counter hash of (seed, position);
# it will not reproduce PyTorch's RNG stream — vary the seed per step.

if __name__ == "__main__":
    key = jax.random.PRNGKey(0)
    kx, k1, kb1, k2, kb2 = jax.random.split(key, 5)

    # Deterministic synthetic parameters (shapes implied by the module).
    x = jax.random.normal(kx, (N, F_IN), dtype=jnp.float32)
    w1 = jax.random.normal(k1, (F_IN, HID), dtype=jnp.float32) * (1.0 / jnp.sqrt(F_IN))
    b1 = jax.random.normal(kb1, (1, HID), dtype=jnp.float32) * 0.01
    w2 = jax.random.normal(k2, (HID, F_OUT), dtype=jnp.float32) * (1.0 / jnp.sqrt(HID))
    b2 = jax.random.normal(kb2, (1, F_OUT), dtype=jnp.float32) * 0.01
    gamma = jnp.ones((1, F_OUT), dtype=jnp.float32)
    beta = jnp.zeros((1, F_OUT), dtype=jnp.float32)
    seed = jnp.array([1234], dtype=jnp.int32)

    # One-time prep (folded + padded weights); NOT in the per-call path.
    wc_p, params = prepare_params(w1, b1, w2, b2, gamma, beta)
    wc_p, params = jax.block_until_ready((wc_p, params))

    fwd = jax.jit(compose_forward)
    out = fwd(x, wc_p, params, seed)
    jax.block_until_ready(out)
    assert out.shape == (N, F_OUT) and out.dtype == jnp.float32
    assert bool(jnp.all(jnp.isfinite(out)))
    print("KERNEL_OK")
</pallas_src>

<mosaic_0001>
module attributes {stable_mosaic.version = 11 : i64} {
  func.func @compose_kernel(%arg0: memref<1xi32, #tpu.memory_space<smem>>, %arg1: memref<8x128xf32, #tpu.memory_space<vmem>>, %arg2: memref<128x128xf32, #tpu.memory_space<vmem>>, %arg3: memref<8x128xf32, #tpu.memory_space<vmem>>, %arg4: memref<8x128xf32, #tpu.memory_space<vmem>>) attributes {dimension_semantics = [], scalar_prefetch = 0 : i64, scratch_operands = 0 : i64, tpu.core_type = #tpu.core_type<tc>} {
    %c0 = arith.constant 0 : index
    %c0_0 = arith.constant 0 : index
    %0 = vector.load %arg1[%c0, %c0_0] : memref<8x128xf32, #tpu.memory_space<vmem>>, vector<8x128xf32>
    %c0_1 = arith.constant 0 : index
    %c0_2 = arith.constant 0 : index
    %1 = vector.load %arg2[%c0_1, %c0_2] : memref<128x128xf32, #tpu.memory_space<vmem>>, vector<128x128xf32>
    %cst = arith.constant dense<0.000000e+00> : vector<8x128xf32>
    %2 = tpu.matmul %0, %1, %cst {dimension_numbers = #tpu.dot_dimension_numbers<[1], [0], [0], [1], [0, 0, 1, 1], [], []>} : vector<8x128xf32>, vector<128x128xf32>, vector<8x128xf32> -> vector<8x128xf32>
    %c0_3 = arith.constant 0 : index
    %c0_4 = arith.constant 0 : index
    %3 = vector.load %arg3[%c0_3, %c0_4] : memref<8x128xf32, #tpu.memory_space<vmem>>, vector<1x128xf32>
    %4 = vector.broadcast %3 : vector<1x128xf32> to vector<8x128xf32>
    %5 = arith.addf %2, %4 : vector<8x128xf32>
    %cst_5 = arith.constant dense<0.000000e+00> : vector<128xf32>
    %6 = vector.multi_reduction <add>, %5, %cst_5 [0] : vector<8x128xf32> to vector<128xf32>
    %7 = vector.shape_cast %6 : vector<128xf32> to vector<1x128xf32>
    %cst_6 = arith.constant 8.000000e+00 : f32
    %8 = vector.broadcast %cst_6 : f32 to vector<1x128xf32>
    %9 = arith.divf %7, %8 : vector<1x128xf32>
    %10 = arith.mulf %5, %5 : vector<8x128xf32>
    %cst_7 = arith.constant dense<0.000000e+00> : vector<128xf32>
    %11 = vector.multi_reduction <add>, %10, %cst_7 [0] : vector<8x128xf32> to vector<128xf32>
    %12 = vector.shape_cast %11 : vector<128xf32> to vector<1x128xf32>
    %cst_8 = arith.constant 8.000000e+00 : f32
    %13 = vector.broadcast %cst_8 : f32 to vector<1x128xf32>
    %14 = arith.divf %12, %13 : vector<1x128xf32>
    %15 = arith.mulf %9, %9 : vector<1x128xf32>
    %16 = arith.subf %14, %15 : vector<1x128xf32>
    %cst_9 = arith.constant 9.99999974E-6 : f32
    %17 = vector.broadcast %cst_9 : f32 to vector<1x128xf32>
    %18 = arith.addf %16, %17 : vector<1x128xf32>
    %19 = math.rsqrt %18 : vector<1x128xf32>
    %c1 = arith.constant 1 : index
    %c0_10 = arith.constant 0 : index
    %20 = vector.load %arg3[%c1, %c0_10] : memref<8x128xf32, #tpu.memory_space<vmem>>, vector<1x128xf32>
    %21 = arith.mulf %20, %19 : vector<1x128xf32>
    %cst_11 = arith.constant 1.11111116 : f32
    %22 = vector.broadcast %cst_11 : f32 to vector<1x128xf32>
    %23 = arith.mulf %21, %22 : vector<1x128xf32>
    %c2 = arith.constant 2 : index
    %c0_12 = arith.constant 0 : index
    %24 = vector.load %arg3[%c2, %c0_12] : memref<8x128xf32, #tpu.memory_space<vmem>>, vector<1x128xf32>
    %25 = arith.mulf %9, %21 : vector<1x128xf32>
    %26 = arith.subf %24, %25 : vector<1x128xf32>
    %cst_13 = arith.constant 1.11111116 : f32
    %27 = vector.broadcast %cst_13 : f32 to vector<1x128xf32>
    %28 = arith.mulf %26, %27 : vector<1x128xf32>
    %c0_14 = arith.constant 0 : index
    %29 = memref.load %arg0[%c0_14] : memref<1xi32, #tpu.memory_space<smem>>
    %30 = tpu.iota {dimensions = array<i32: 0>} : vector<8x128xi32>
    %31 = tpu.iota {dimensions = array<i32: 1>} : vector<8x128xi32>
    %c128_i32 = arith.constant 128 : i32
    %32 = vector.broadcast %c128_i32 : i32 to vector<8x128xi32>
    %33 = arith.muli %30, %32 : vector<8x128xi32>
    %34 = arith.addi %33, %31 : vector<8x128xi32>
    %c-1640531527_i32 = arith.constant -1640531527 : i32
    %35 = arith.muli %29, %c-1640531527_i32 : i32
    %36 = vector.broadcast %35 : i32 to vector<8x128xi32>
    %37 = arith.addi %34, %36 : vector<8x128xi32>
    %c-1640531535_i32 = arith.constant -1640531535 : i32
    %38 = vector.broadcast %c-1640531535_i32 : i32 to vector<8x128xi32>
    %39 = arith.muli %37, %38 : vector<8x128xi32>
    %c16_i32 = arith.constant 16 : i32
    %40 = vector.broadcast %c16_i32 : i32 to vector<8x128xi32>
    %41 = arith.shrui %39, %40 : vector<8x128xi32>
    %42 = arith.xori %39, %41 : vector<8x128xi32>
    %c-2048144777_i32 = arith.constant -2048144777 : i32
    %43 = vector.broadcast %c-2048144777_i32 : i32 to vector<8x128xi32>
    %44 = arith.muli %42, %43 : vector<8x128xi32>
    %c13_i32 = arith.constant 13 : i32
    %45 = vector.broadcast %c13_i32 : i32 to vector<8x128xi32>
    %46 = arith.shrui %44, %45 : vector<8x128xi32>
    %47 = arith.xori %44, %46 : vector<8x128xi32>
    %c-1028477379_i32 = arith.constant -1028477379 : i32
    %48 = vector.broadcast %c-1028477379_i32 : i32 to vector<8x128xi32>
    %49 = arith.muli %47, %48 : vector<8x128xi32>
    %c16_i32_15 = arith.constant 16 : i32
    %50 = vector.broadcast %c16_i32_15 : i32 to vector<8x128xi32>
    %51 = arith.shrui %49, %50 : vector<8x128xi32>
    %52 = arith.xori %49, %51 : vector<8x128xi32>
    %c429496729_i32 = arith.constant 429496729 : i32
    %53 = vector.broadcast %c429496729_i32 : i32 to vector<8x128xi32>
    %54 = arith.cmpi uge, %52, %53 : vector<8x128xi32>
    %55 = vector.broadcast %23 : vector<1x128xf32> to vector<8x128xf32>
    %56 = arith.mulf %5, %55 : vector<8x128xf32>
    %57 = vector.broadcast %28 : vector<1x128xf32> to vector<8x128xf32>
    %58 = arith.addf %56, %57 : vector<8x128xf32>
    %cst_16 = arith.constant 0.000000e+00 : f32
    %59 = vector.broadcast %cst_16 : f32 to vector<8x128xf32>
    %60 = arith.select %54, %58, %59 : vector<8x128xi1>, vector<8x128xf32>
    %61 = arith.addf %60, %0 : vector<8x128xf32>
    %c0_17 = arith.constant 0 : index
    %c0_18 = arith.constant 0 : index
    %62 = vector.load %arg4[%c0_17, %c0_18] : memref<8x128xf32, #tpu.memory_space<vmem>>, vector<8x128xf32>
    tpu.vector_store %arg4[%c0_17, %c0_18], %61 {strides = array<i32>} : memref<8x128xf32, #tpu.memory_space<vmem>>, vector<8x128xf32>,
    return
  }
}

</mosaic_0001>

<llo_original>
// kernel: compose_forward.1
$region0: #{compose_forward.1}
  #allocation0 [shape = 'u32[]', space=smem, size = 0x4, offset = 0x4, fixed_abs, tag = 'smem constant byte address 0x4 - core index']
  #allocation1 [shape = 'u32[144,128]{1,0:T(1,128)}', space=vmem, size = 0x12000, scoped, tag = 'internal scratch']
  #allocation2 [shape = 's32[1]{0:T(128)S(6)}', space=smem, size = 0x200, scoped, tag = 'scoped memory for compose_forward.1']
  %s0 = inlined_call_operand.<no memory space> [shape: s32[1], index: 0, kind: input, shape index: {}]
  %s1 = inlined_call_operand.vmem [shape: f32[8,128], index: 1, kind: input, shape index: {}]
  %s2 = inlined_call_operand.hbm [shape: f32[128,128], index: 2, kind: input, shape index: {}]
  %s3 = inlined_call_operand.vmem [shape: f32[8,128], index: 3, kind: input, shape index: {}]
  %s4 = inlined_call_operand.hbm [shape: f32[8,128], index: 4, kind: output, shape index: {}]
  %s5 = sld [smem:[#allocation0]]
  $region30: #{compose_forward.1} parent=0
    _
  %s7 = ssub.s32 1, %s5
  %s8 = scalar_select 0, %s7, %s5
  %9 = sst [smem:[#allocation2]] %s0
  $region1: #{compose_forward.1} parent=0
    #allocation3 [shape = 'u8[65536]{0}', space=vmem, size = 0x10000, scoped, tag = 'input window, operand 2, single buffered']
    #allocation4 [shape = 's32[1]{0}', space=sflag, size = 0x4, scoped, tag = 'scoped memory for compose_forward.1']
    #allocation5 [shape = 's32[1]{0}', space=sflag, size = 0x4, scoped, tag = 'scoped memory for compose_forward.1']
    #allocation6 [shape = 'u8[4096]{0}', space=vmem, size = 0x1000, scoped, tag = 'output window, operand 0, single buffered']
    %10 = vsyncpa [#allocation4], 0
    %11 = vsyncpa [#allocation5], 0
    // Predicated region
    $region2: #{compose_forward.1} parent=1 // pred_check
      _
    $region3: #{compose_forward.1} parent=1 // pred_check_branch
      %13 = sbr.rel (0) target = $region5
    $region4: #{compose_forward.1} parent=1 // pred_region
      _
    $region5: #{compose_forward.1} parent=1 // pred_fallthru
      _
    // Predicated region
    $region6: #{compose_forward.1} parent=1 // pred_check
      _
    $region7: #{compose_forward.1} parent=1 // pred_check_branch
      %15 = sbr.rel (0) target = $region9
    $region8: #{compose_forward.1} parent=1 // pred_region
      _
    $region9: #{compose_forward.1} parent=1 // pred_fallthru
      _
    // Predicated region
    $region10: #{compose_forward.1} parent=1 // pred_check
      _
    $region11: #{compose_forward.1} parent=1 // pred_check_branch
      %17 = sbr.rel (0) target = $region13
    $region12: #{compose_forward.1} parent=1 // pred_region
      %s19 = ssub.s32 2048, 2048
      %20 = vsyncadd [#allocation4], %s19
      %s21 = sshll.u32 [#allocation3], 4
      %s22 = int_to_ptr.vmem [resolvable:$true] %s21
      %27 = dma.hbm_to_vmem [thread:$0]  %s2, 2048, %s22, [#allocation4], 128, 128, 8
    $region13: #{compose_forward.1} parent=1 // pred_fallthru
      _
    // Predicated region
    $region14: #{compose_forward.1} parent=1 // pred_check
      _
    $region15: #{compose_forward.1} parent=1 // pred_check_branch
      %29 = sbr.rel (0) target = $region17
    $region16: #{compose_forward.1} parent=1 // pred_region
      _
    $region17: #{compose_forward.1} parent=1 // pred_fallthru
      _
    // Predicated region
    $region18: #{compose_forward.1} parent=1 // pred_check
      _
    $region19: #{compose_forward.1} parent=1 // pred_check_branch
      %31 = sbr.rel (0) target = $region21
    $region20: #{compose_forward.1} parent=1 // pred_region
      %32 = dma.done [#allocation4], 2048
    $region21: #{compose_forward.1} parent=1 // pred_fallthru
      _
    %v33 = vld [vmem:[%s1] sm:$0xff]
    %v34 = vld [vmem:[#allocation3] sm:$0xff]
    %v35 = vld [vmem:[#allocation3 + $0x8] sm:$0xff]
    %v36 = vld [vmem:[#allocation3 + $0x10] sm:$0xff]
    %v37 = vld [vmem:[#allocation3 + $0x18] sm:$0xff]
    %v38 = vld [vmem:[#allocation3 + $0x20] sm:$0xff]
    %v39 = vld [vmem:[#allocation3 + $0x28] sm:$0xff]
    %v40 = vld [vmem:[#allocation3 + $0x30] sm:$0xff]
    %v41 = vld [vmem:[#allocation3 + $0x38] sm:$0xff]
    %v42 = vld [vmem:[#allocation3 + $0x40] sm:$0xff]
    %v43 = vld [vmem:[#allocation3 + $0x48] sm:$0xff]
    %v44 = vld [vmem:[#allocation3 + $0x50] sm:$0xff]
    %v45 = vld [vmem:[#allocation3 + $0x58] sm:$0xff]
    %v46 = vld [vmem:[#allocation3 + $0x60] sm:$0xff]
    %v47 = vld [vmem:[#allocation3 + $0x68] sm:$0xff]
    %v48 = vld [vmem:[#allocation3 + $0x70] sm:$0xff]
    %v49 = vld [vmem:[#allocation3 + $0x78] sm:$0xff]
    %v50 = vld [vmem:[%s3] sm:$0x1]
    %v51 = vlaneseq
    %v52 = vshrl.u32 %v51, 7
    %v53 = vsub.s32 0, %v52
    %v54 = vrot.slane %v50, %v53
    %55 = vmatprep.subr.mxu0 0.0
    %56 = vmatpush1.msra.mxu0 %v34
    %57 = vmatprep.subr.mxu0 0.0
    %58 = vmatpush1.msra.mxu0 %v35
    %59 = vmatprep.subr.mxu0 0.0
    %60 = vmatpush1.msra.mxu0 %v36
    %61 = vmatprep.subr.mxu0 0.0
    %62 = vmatpush1.msra.mxu0 %v37
    %63 = vmatprep.subr.mxu0 0.0
    %64 = vmatpush1.msra.mxu0 %v38
    %65 = vmatprep.subr.mxu0 0.0
    %66 = vmatpush1.msra.mxu0 %v39
    %67 = vmatprep.subr.mxu0 0.0
    %68 = vmatpush1.msra.mxu0 %v40
    %69 = vmatprep.subr.mxu0 0.0
    %70 = vmatpush1.msra.mxu0 %v41
    %71 = vmatprep.subr.mxu0 0.0
    %72 = vmatpush1.msra.mxu0 %v42
    %73 = vmatprep.subr.mxu0 0.0
    %74 = vmatpush1.msra.mxu0 %v43
    %75 = vmatprep.subr.mxu0 0.0
    %76 = vmatpush1.msra.mxu0 %v44
    %77 = vmatprep.subr.mxu0 0.0
    %78 = vmatpush1.msra.mxu0 %v45
    %79 = vmatprep.subr.mxu0 0.0
    %80 = vmatpush1.msra.mxu0 %v46
    %81 = vmatprep.subr.mxu0 0.0
    %82 = vmatpush1.msra.mxu0 %v47
    %83 = vmatprep.subr.mxu0 0.0
    %84 = vmatpush1.msra.mxu0 %v48
    %85 = vmatprep.subr.mxu0 0.0
    %86 = vmatpush1.msra.mxu0 %v49
    %87 = vmatprep.subr.mxu0 0.0
    %88 = vmatpush1.msra.mxu0 0.0
    %89 = vmatprep.subr.mxu0 0.0
    %90 = vmatpush1.msra.mxu0 0.0
    %91 = vmatprep.subr.mxu0 0.0
    %92 = vmatpush1.msra.mxu0 0.0
    %93 = vmatprep.subr.mxu0 0.0
    %94 = vmatpush1.msra.mxu0 0.0
    %95 = vmatprep.subr.mxu0 0.0
    %96 = vmatpush1.msra.mxu0 0.0
    %97 = vmatprep.subr.mxu0 0.0
    %98 = vmatpush1.msra.mxu0 0.0
    %99 = vmatprep.subr.mxu0 0.0
    %100 = vmatpush1.msra.mxu0 0.0
    %101 = vmatprep.subr.mxu0 0.0
    %102 = vmatpush1.msra.mxu0 0.0
    %103 = vmatprep.subr.mxu0 0.0
    %104 = vmatpush1.msra.mxu0 0.0
    %105 = vmatprep.subr.mxu0 0.0
    %106 = vmatpush1.msra.mxu0 0.0
    %107 = vmatprep.subr.mxu0 0.0
    %108 = vmatpush1.msra.mxu0 0.0
    %109 = vmatprep.subr.mxu0 0.0
    %110 = vmatpush1.msra.mxu0 0.0
    %111 = vmatprep.subr.mxu0 0.0
    %112 = vmatpush1.msra.mxu0 0.0
    %113 = vmatprep.subr.mxu0 0.0
    %114 = vmatpush1.msra.mxu0 0.0
    %115 = vmatprep.subr.mxu0 0.0
    %116 = vmatpush1.msra.mxu0 0.0
    %117 = vmatprep.subr.mxu0 0.0
    %118 = vmatpush1.msra.mxu0 0.0
    %119 = vmatprep.mubr.f32.mxu0 0.0
    %120 = vmatmul.mubr.f32.gmra.mrb[0].mxu0 %v33
    %v121 = vpop.f32.mrb[0].mxu0
    %v122 = vadd.f32 %v54, %v121
    %v123 = vpop.f32.mrb[0].mxu0
    %124 = vdwg.mxu0
    %v125 = vrot.slane %v122, 4
    %v126 = vadd.f32 %v122, %v125
    %v127 = vrot.slane %v126, 2
    %v128 = vadd.f32 %v126, %v127
    %v129 = vrot.slane %v128, 1
    %v130 = vadd.f32 %v128, %v129
    %v131 = vrcp.pop 8.0
    %v132 = vmul.f32 %v130, %v131
    %v133 = vmul.f32 %v122, %v122
    %v134 = vrot.slane %v133, 4
    %v135 = vadd.f32 %v133, %v134
    %v136 = vrot.slane %v135, 2
    %v137 = vadd.f32 %v135, %v136
    %v138 = vrot.slane %v137, 1
    %v139 = vadd.f32 %v137, %v138
    %v140 = vmul.f32 %v139, %v131
    %v141 = vmul.f32 %v132, %v132
    %v142 = vsub.f32 %v140, %v141
    %v143 = vadd.f32 %v142, 1e-05
    %v144 = vrsqrt.pop %v143
    %v145 = vld [vmem:[%s3 + $0x1] sm:$0x1]
    %v146 = vmul.f32 %v145, %v144
    %v147 = vmul.f32 %v146, 1.1111112
    %v148 = vld [vmem:[%s3 + $0x2] sm:$0x1]
    %v149 = vmul.f32 %v132, %v146
    %v150 = vsub.f32 %v148, %v149
    %v151 = vmul.f32 %v150, 1.1111112
    %s152 = sld [smem:[#allocation2]]
    %v153 = vlaneseq
    %v154 = vshrl.u32 %v153, 7
    %v155 = vlaneseq
    %v156 = vand.u32 %v155, 127
    %v157 = vmul.u32 %v154, 128
    %v158 = vadd.s32 %v157, %v156
    %s159 = smul.u32 %s152, 2654435769
    %v160 = vstv %s159
    %v161 = vadd.s32 %v158, %v160
    %v162 = vmul.u32 %v161, 2654435761
    %v163 = vshrl.u32 %v162, 16
    %v164 = vxor.u32 %v162, %v163
    %v165 = vmul.u32 %v164, 2246822519
    %v166 = vshrl.u32 %v165, 13
    %v167 = vxor.u32 %v165, %v166
    %v168 = vmul.u32 %v167, 3266489917
    %v169 = vshrl.u32 %v168, 16
    %v170 = vxor.u32 %v168, %v169
    %vm171 = vcmp.ge.u32.totalorder %v170, 429496729
    %v172 = vlaneseq
    %v173 = vshrl.u32 %v172, 7
    %v174 = vsub.s32 0, %v173
    %v175 = vrot.slane %v147, %v174
    %v176 = vmul.f32 %v122, %v175
    %v177 = vlaneseq
    %v178 = vshrl.u32 %v177, 7
    %v179 = vsub.s32 0, %v178
    %v180 = vrot.slane %v151, %v179
    %v181 = vadd.f32 %v176, %v180
    %v182 = vsel %vm171, %v181, 0.0
    %v183 = vadd.f32 %v182, %v33
    %184 = vst [vmem:[#allocation6] sm:$0xff] %v183
    // Predicated region
    $region22: #{compose_forward.1} parent=1 // pred_check
      _
    $region23: #{compose_forward.1} parent=1 // pred_check_branch
      %186 = sbr.rel (0) target = $region25
    $region24: #{compose_forward.1} parent=1 // pred_region
      %s188 = ssub.s32 128, 128
      %189 = vsyncadd [#allocation5], %s188
      %s191 = sshll.u32 [#allocation6], 4
      %s192 = int_to_ptr.vmem [resolvable:$true] %s191
      %194 = dma.vmem_to_hbm [thread:$0]  %s192, 128, %s4, [#allocation5]
    $region25: #{compose_forward.1} parent=1 // pred_fallthru
      _
    // Predicated region
    $region26: #{compose_forward.1} parent=1 // pred_check
      _
    $region27: #{compose_forward.1} parent=1 // pred_check_branch
      %196 = sbr.rel (0) target = $region29
    $region28: #{compose_forward.1} parent=1 // pred_region
      %197 = dma.done [#allocation5], 128
    $region29: #{compose_forward.1} parent=1 // pred_fallthru
      _
    %198 = vsyncpa [#allocation4], 1
    %199 = vsyncpa [#allocation5], 1

</llo_original>
